<compile_context>
chip_gen: v7x
topology: tpu7x:2x2x1
jax: 0.10.0
libtpu: 0.0.40
codegen_flags: <defaults>
</compile_context>

<pallas_src>
import functools

import jax
import jax.numpy as jnp
from jax.experimental import pallas as pl
from jax.experimental.pallas import tpu as pltpu

_EPS = 1e-5
_LANE = 128
_MAX_CHUNKS = 64  # cap tile width at 64*128 = 8192 lanes (roofline-saturating)


def _vmem_budget_bytes():
    """Conservative VMEM budget for the pipelined x/out blocks (all TPU gens)."""
    try:
        cap = pltpu.get_tpu_info().vmem_capacity_bytes
        return int(max(4 << 20, min(cap // 10, 12 << 20)))
    except Exception:
        return 8 << 20


def _fused_bn_kernel(x_ref, g1_ref, b1_ref, g2_ref, o_ref,
                     sum_ref, sq_ref, piv_ref, scale_ref, shift_ref,
                     *, chunk_w, k_chunks, tile_last, hw, inv_l, ragged, c_dim):
    p = pl.program_id(0)   # 0 = stats pass, 1 = apply pass
    nb = pl.program_id(1)
    t = pl.program_id(2)
    unroll = min(k_chunks, 8)

    # ---------------- phase 0: per-channel pivot-shifted sum / sumsq --------
    @pl.when(p == 0)
    def _stats():
        @pl.when((nb == 0) & (t == 0))
        def _init():
            # Pivot (first spatial element per channel) kills the catastrophic
            # cancellation of E[x^2] - mean^2 for non-centered inputs.
            piv_ref[...] = x_ref[0, :, 0:1].astype(jnp.float32)
            sum_ref[...] = jnp.zeros_like(sum_ref)
            sq_ref[...] = jnp.zeros_like(sq_ref)

        piv = piv_ref[...]                       # (C, 1)
        base = t * tile_last                     # global lane offset of tile

        def fold(i, carry):
            s, ss = carry
            off = pl.multiple_of(i * chunk_w, chunk_w)
            d = x_ref[:, :, pl.ds(off, chunk_w)].astype(jnp.float32) - piv
            if ragged:
                lane = jax.lax.broadcasted_iota(jnp.int32, (c_dim, chunk_w), 1)
                d = jnp.where(base + off + lane < hw, d, 0.0)
            s = s + jnp.sum(d, axis=0)           # (C, chunk_w)
            ss = ss + jnp.sum(d * d, axis=0)
            return s, ss

        s, ss = jax.lax.fori_loop(0, k_chunks, fold,
                                  (sum_ref[...], sq_ref[...]), unroll=unroll)
        sum_ref[...] = s
        sq_ref[...] = ss

    # -------- phase boundary: fold the 3-BN cascade into one affine ---------
    @pl.when((p == 1) & (nb == 0) & (t == 0))
    def _finalize():
        piv = piv_ref[...]                                    # (C, 1)
        s = jnp.sum(sum_ref[...], axis=-1, keepdims=True)     # lane reduce
        ss = jnp.sum(sq_ref[...], axis=-1, keepdims=True)
        mean_d = s * inv_l
        mu = piv + mean_d
        var = jnp.maximum(ss * inv_l - mean_d * mean_d, 0.0)  # biased variance
        g1 = g1_ref[...]
        b1 = b1_ref[...]
        g2 = g2_ref[...]
        a = g1 * jax.lax.rsqrt(var + _EPS)                    # bn1
        c = g2 * a * jax.lax.rsqrt(a * a * var + _EPS)        # bn2 (beta2 cancels)
        s3 = g1 * c * jax.lax.rsqrt(c * c * var + _EPS)       # bn1 again
        scale_ref[...] = jnp.broadcast_to(s3, scale_ref.shape)        # lane-dense
        shift_ref[...] = jnp.broadcast_to(b1 - s3 * mu, shift_ref.shape)

    # ---------------- phase 1: apply q = scale[c]*x + shift[c] --------------
    @pl.when(p == 1)
    def _apply():
        scale = scale_ref[...]                   # (C, chunk_w)
        shift = shift_ref[...]

        def body(i, carry):
            off = pl.multiple_of(i * chunk_w, chunk_w)
            xc = x_ref[:, :, pl.ds(off, chunk_w)].astype(jnp.float32)
            o_ref[:, :, pl.ds(off, chunk_w)] = (xc * scale + shift).astype(o_ref.dtype)
            return carry

        jax.lax.fori_loop(0, k_chunks, body, 0, unroll=unroll)


def model_forward(x_nchw, gamma1, beta1, gamma2, beta2):
    """Forward of Model: q = bn1(bn2(bn1(x))), training-mode batch norm."""
    N, C, H, W = x_nchw.shape
    hw = H * W
    x = x_nchw.reshape(N, C, hw)                 # free reshape, native layout

    itemsize = jnp.dtype(x_nchw.dtype).itemsize
    c_pad = ((C + 7) // 8) * 8                   # sublane-padded channel dim

    # ----- tile selection: fixed large lane tiles, cdiv grid, no host pad ----
    chunk_w = _LANE if hw >= _LANE else hw
    full_chunks = max(1, hw // chunk_w)
    budget = _vmem_budget_bytes()
    per_chunk_bytes = 4 * c_pad * chunk_w * itemsize      # (x + out) double-buffered
    budget_chunks = max(1, budget // per_chunk_bytes)
    tile_chunks = int(min(full_chunks, budget_chunks, _MAX_CHUNKS))
    tile_last = tile_chunks * chunk_w
    num_t = int(pl.cdiv(hw, tile_last))
    ragged = (hw % tile_last) != 0

    # Fold batch into the block when everything fits: x is then HBM-read once.
    if num_t == 1 and not ragged and 4 * N * c_pad * tile_last * itemsize <= budget:
        bn = N
    else:
        bn = 1
    grid = (2, N // bn, num_t)

    inv_l = 1.0 / float(N * hw)

    kernel = functools.partial(
        _fused_bn_kernel,
        chunk_w=chunk_w, k_chunks=tile_chunks, tile_last=tile_last,
        hw=hw, inv_l=inv_l, ragged=ragged, c_dim=C)

    g1 = gamma1.astype(jnp.float32).reshape(C, 1)
    b1 = beta1.astype(jnp.float32).reshape(C, 1)
    g2 = gamma2.astype(jnp.float32).reshape(C, 1)
    del beta2  # cancels exactly in the fused cascade (see header)

    out = pl.pallas_call(
        kernel,
        out_shape=jax.ShapeDtypeStruct((N, C, hw), x_nchw.dtype),
        grid_spec=pltpu.PrefetchScalarGridSpec(
            num_scalar_prefetch=0,
            grid=grid,
            in_specs=[
                pl.BlockSpec((bn, C, tile_last), lambda p, n, t: (n, 0, t)),
                pl.BlockSpec((C, 1), lambda p, n, t: (0, 0)),
                pl.BlockSpec((C, 1), lambda p, n, t: (0, 0)),
                pl.BlockSpec((C, 1), lambda p, n, t: (0, 0)),
            ],
            # Phase 0 pins the output block index at (0,0,0) (never written),
            # phase 1 walks and writes every block exactly once.
            out_specs=pl.BlockSpec((bn, C, tile_last),
                                   lambda p, n, t: (n * p, 0, t * p)),
            scratch_shapes=[
                pltpu.VMEM((C, chunk_w), jnp.float32),   # sum(x - pivot)
                pltpu.VMEM((C, chunk_w), jnp.float32),   # sum((x - pivot)^2)
                pltpu.VMEM((C, 1), jnp.float32),         # per-channel pivot
                pltpu.VMEM((C, chunk_w), jnp.float32),   # fused scale (lane-dense)
                pltpu.VMEM((C, chunk_w), jnp.float32),   # fused shift (lane-dense)
            ],
        ),
        compiler_params=pltpu.CompilerParams(
            dimension_semantics=("arbitrary", "arbitrary", "arbitrary")),
    )(x, g1, b1, g2)

    return out.reshape(N, C, H, W)


def _reference(x_nchw, gamma1, beta1, gamma2, beta2):
    """Pure-JAX reference: three sequential training-mode batch norms."""
    def bn(x, g, b):
        mean = jnp.mean(x, axis=(0, 2, 3), keepdims=True)
        var = jnp.mean((x - mean) ** 2, axis=(0, 2, 3), keepdims=True)
        return (x - mean) * jax.lax.rsqrt(var + _EPS) * g[None, :, None, None] \
            + b[None, :, None, None]
    y = bn(x_nchw, gamma1, beta1)
    z = bn(y, gamma2, beta2)
    return bn(z, gamma1, beta1)


if __name__ == "__main__":
    key = jax.random.PRNGKey(0)
    k_x, k_g1, k_b1, k_g2, k_b2 = jax.random.split(key, 5)

    N, C, H, W = 2, 5, 16, 16   # bn1 is BatchNorm2d(5) -> 5-channel input
    x = jax.random.normal(k_x, (N, C, H, W), dtype=jnp.float32)

    # PyTorch default init is weight=1, bias=0; use non-trivial affine params
    # here to exercise the fused-affine path (same training-mode BN semantics).
    gamma1 = 0.5 + jax.random.uniform(k_g1, (C,), jnp.float32)
    beta1 = 0.1 * jax.random.normal(k_b1, (C,), jnp.float32)
    gamma2 = 0.5 + jax.random.uniform(k_g2, (C,), jnp.float32)
    beta2 = 0.1 * jax.random.normal(k_b2, (C,), jnp.float32)

    out = model_forward(x, gamma1, beta1, gamma2, beta2)
    out = jax.block_until_ready(out)

    ref = _reference(x, gamma1, beta1, gamma2, beta2)
    assert out.shape == (N, C, H, W)
    err = float(jnp.max(jnp.abs(out - ref)))
    assert err < 5e-4, f"mismatch vs reference: max abs err = {err}"

    print("KERNEL_OK")
</pallas_src>

<mosaic_0001>
module attributes {stable_mosaic.version = 11 : i64} {
  func.func @_fused_bn_kernel(%arg0: i32, %arg1: i32, %arg2: i32, %arg3: memref<2x5x256xf32, #tpu.memory_space<vmem>>, %arg4: memref<5x1xf32, #tpu.memory_space<vmem>>, %arg5: memref<5x1xf32, #tpu.memory_space<vmem>>, %arg6: memref<5x1xf32, #tpu.memory_space<vmem>>, %arg7: memref<2x5x256xf32, #tpu.memory_space<vmem>>, %arg8: memref<5x128xf32, #tpu.memory_space<vmem>>, %arg9: memref<5x128xf32, #tpu.memory_space<vmem>>, %arg10: memref<5x1xf32, #tpu.memory_space<vmem>>, %arg11: memref<5x128xf32, #tpu.memory_space<vmem>>, %arg12: memref<5x128xf32, #tpu.memory_space<vmem>>) attributes {dimension_semantics = [#tpu.dimension_semantics<arbitrary>, #tpu.dimension_semantics<arbitrary>, #tpu.dimension_semantics<arbitrary>], iteration_bounds = array<i64: 2, 1, 1>, scalar_prefetch = 0 : i64, scratch_operands = 5 : i64, tpu.core_type = #tpu.core_type<tc>, window_params = [{transform_indices = @transform_0, window_bounds = array<i64: 2, 5, 256>}, {pipeline_mode = #tpu.pipeline_mode<synchronous>, transform_indices = @transform_1, window_bounds = array<i64: 5, 1>}, {pipeline_mode = #tpu.pipeline_mode<synchronous>, transform_indices = @transform_2, window_bounds = array<i64: 5, 1>}, {pipeline_mode = #tpu.pipeline_mode<synchronous>, transform_indices = @transform_3, window_bounds = array<i64: 5, 1>}, {transform_indices = @transform_4, window_bounds = array<i64: 2, 5, 256>}]} {
    %c0_i32 = arith.constant 0 : i32
    %0 = arith.cmpi eq, %arg0, %c0_i32 : i32
    %1 = arith.extui %0 : i1 to i32
    %c0_i32_0 = arith.constant 0 : i32
    %2 = arith.cmpi ne, %1, %c0_i32_0 : i32
    scf.if %2 {
      %c0_i32_6 = arith.constant 0 : i32
      %13 = arith.cmpi eq, %arg1, %c0_i32_6 : i32
      %c0_i32_7 = arith.constant 0 : i32
      %14 = arith.cmpi eq, %arg2, %c0_i32_7 : i32
      %15 = arith.andi %13, %14 : i1
      %16 = arith.extui %15 : i1 to i32
      %c0_i32_8 = arith.constant 0 : i32
      %17 = arith.cmpi ne, %16, %c0_i32_8 : i32
      scf.if %17 {
        %c0_28 = arith.constant 0 : index
        %c0_29 = arith.constant 0 : index
        %c0_30 = arith.constant 0 : index
        %47 = vector.load %arg3[%c0_28, %c0_29, %c0_30] : memref<2x5x256xf32, #tpu.memory_space<vmem>>, vector<1x5x1xf32>
        %48 = vector.shape_cast %47 : vector<1x5x1xf32> to vector<5x1xf32>
        %c0_31 = arith.constant 0 : index
        %c0_32 = arith.constant 0 : index
        %49 = vector.load %arg10[%c0_31, %c0_32] : memref<5x1xf32, #tpu.memory_space<vmem>>, vector<5x1xf32>
        tpu.vector_store %arg10[%c0_31, %c0_32], %48 {strides = array<i32>} : memref<5x1xf32, #tpu.memory_space<vmem>>, vector<5x1xf32>,
        %cst_33 = arith.constant 0.000000e+00 : f32
        %50 = vector.broadcast %cst_33 : f32 to vector<5x128xf32>
        %c0_34 = arith.constant 0 : index
        %c0_35 = arith.constant 0 : index
        %51 = vector.load %arg8[%c0_34, %c0_35] : memref<5x128xf32, #tpu.memory_space<vmem>>, vector<5x128xf32>
        tpu.vector_store %arg8[%c0_34, %c0_35], %50 {strides = array<i32>} : memref<5x128xf32, #tpu.memory_space<vmem>>, vector<5x128xf32>,
        %cst_36 = arith.constant 0.000000e+00 : f32
        %52 = vector.broadcast %cst_36 : f32 to vector<5x128xf32>
        %c0_37 = arith.constant 0 : index
        %c0_38 = arith.constant 0 : index
        %53 = vector.load %arg9[%c0_37, %c0_38] : memref<5x128xf32, #tpu.memory_space<vmem>>, vector<5x128xf32>
        tpu.vector_store %arg9[%c0_37, %c0_38], %52 {strides = array<i32>} : memref<5x128xf32, #tpu.memory_space<vmem>>, vector<5x128xf32>,
      } else {
      }
      %c0 = arith.constant 0 : index
      %c0_9 = arith.constant 0 : index
      %18 = vector.load %arg10[%c0, %c0_9] : memref<5x1xf32, #tpu.memory_space<vmem>>, vector<5x1xf32>
      %c0_10 = arith.constant 0 : index
      %c0_11 = arith.constant 0 : index
      %19 = vector.load %arg8[%c0_10, %c0_11] : memref<5x128xf32, #tpu.memory_space<vmem>>, vector<5x128xf32>
      %c0_12 = arith.constant 0 : index
      %c0_13 = arith.constant 0 : index
      %20 = vector.load %arg9[%c0_12, %c0_13] : memref<5x128xf32, #tpu.memory_space<vmem>>, vector<5x128xf32>
      %c0_i32_14 = arith.constant 0 : i32
      %c128_i32 = arith.constant 128 : i32
      %21 = arith.muli %c0_i32_14, %c128_i32 : i32
      %22 = tpu.assume_multiple %21, 128 : i32
      %c0_15 = arith.constant 0 : index
      %c0_16 = arith.constant 0 : index
      %23 = arith.index_cast %22 : i32 to index
      %24 = vector.load %arg3[%c0_15, %c0_16, %23] : memref<2x5x256xf32, #tpu.memory_space<vmem>>, vector<2x5x128xf32>
      %25 = vector.shape_cast %18 : vector<5x1xf32> to vector<1x5x1xf32>
      %26 = vector.broadcast %25 : vector<1x5x1xf32> to vector<2x5x128xf32>
      %27 = arith.subf %24, %26 : vector<2x5x128xf32>
      %cst = arith.constant dense<0.000000e+00> : vector<5x128xf32>
      %28 = vector.multi_reduction <add>, %27, %cst [0] : vector<2x5x128xf32> to vector<5x128xf32>
      %29 = arith.addf %19, %28 : vector<5x128xf32>
      %30 = arith.mulf %27, %27 : vector<2x5x128xf32>
      %cst_17 = arith.constant dense<0.000000e+00> : vector<5x128xf32>
      %31 = vector.multi_reduction <add>, %30, %cst_17 [0] : vector<2x5x128xf32> to vector<5x128xf32>
      %32 = arith.addf %20, %31 : vector<5x128xf32>
      %c1_i32_18 = arith.constant 1 : i32
      %c128_i32_19 = arith.constant 128 : i32
      %33 = arith.muli %c1_i32_18, %c128_i32_19 : i32
      %34 = tpu.assume_multiple %33, 128 : i32
      %c0_20 = arith.constant 0 : index
      %c0_21 = arith.constant 0 : index
      %35 = arith.index_cast %34 : i32 to index
      %36 = vector.load %arg3[%c0_20, %c0_21, %35] : memref<2x5x256xf32, #tpu.memory_space<vmem>>, vector<2x5x128xf32>
      %37 = vector.shape_cast %18 : vector<5x1xf32> to vector<1x5x1xf32>
      %38 = vector.broadcast %37 : vector<1x5x1xf32> to vector<2x5x128xf32>
      %39 = arith.subf %36, %38 : vector<2x5x128xf32>
      %cst_22 = arith.constant dense<0.000000e+00> : vector<5x128xf32>
      %40 = vector.multi_reduction <add>, %39, %cst_22 [0] : vector<2x5x128xf32> to vector<5x128xf32>
      %41 = arith.addf %29, %40 : vector<5x128xf32>
      %42 = arith.mulf %39, %39 : vector<2x5x128xf32>
      %cst_23 = arith.constant dense<0.000000e+00> : vector<5x128xf32>
      %43 = vector.multi_reduction <add>, %42, %cst_23 [0] : vector<2x5x128xf32> to vector<5x128xf32>
      %44 = arith.addf %32, %43 : vector<5x128xf32>
      %c2_i32 = arith.constant 2 : i32
      %c0_24 = arith.constant 0 : index
      %c0_25 = arith.constant 0 : index
      %45 = vector.load %arg8[%c0_24, %c0_25] : memref<5x128xf32, #tpu.memory_space<vmem>>, vector<5x128xf32>
      tpu.vector_store %arg8[%c0_24, %c0_25], %41 {strides = array<i32>} : memref<5x128xf32, #tpu.memory_space<vmem>>, vector<5x128xf32>,
      %c0_26 = arith.constant 0 : index
      %c0_27 = arith.constant 0 : index
      %46 = vector.load %arg9[%c0_26, %c0_27] : memref<5x128xf32, #tpu.memory_space<vmem>>, vector<5x128xf32>
      tpu.vector_store %arg9[%c0_26, %c0_27], %44 {strides = array<i32>} : memref<5x128xf32, #tpu.memory_space<vmem>>, vector<5x128xf32>,
    } else {
    }
    %c1_i32 = arith.constant 1 : i32
    %3 = arith.cmpi eq, %arg0, %c1_i32 : i32
    %c0_i32_1 = arith.constant 0 : i32
    %4 = arith.cmpi eq, %arg1, %c0_i32_1 : i32
    %5 = arith.andi %3, %4 : i1
    %c0_i32_2 = arith.constant 0 : i32
    %6 = arith.cmpi eq, %arg2, %c0_i32_2 : i32
    %7 = arith.andi %5, %6 : i1
    %8 = arith.extui %7 : i1 to i32
    %c0_i32_3 = arith.constant 0 : i32
    %9 = arith.cmpi ne, %8, %c0_i32_3 : i32
    scf.if %9 {
      %c0 = arith.constant 0 : index
      %c0_6 = arith.constant 0 : index
      %13 = vector.load %arg10[%c0, %c0_6] : memref<5x1xf32, #tpu.memory_space<vmem>>, vector<5x1xf32>
      %c0_7 = arith.constant 0 : index
      %c0_8 = arith.constant 0 : index
      %14 = vector.load %arg8[%c0_7, %c0_8] : memref<5x128xf32, #tpu.memory_space<vmem>>, vector<5x128xf32>
      %cst = arith.constant dense<0.000000e+00> : vector<5xf32>
      %15 = vector.multi_reduction <add>, %14, %cst [1] : vector<5x128xf32> to vector<5xf32>
      %16 = vector.shape_cast %15 : vector<5xf32> to vector<5x1xf32>
      %c0_9 = arith.constant 0 : index
      %c0_10 = arith.constant 0 : index
      %17 = vector.load %arg9[%c0_9, %c0_10] : memref<5x128xf32, #tpu.memory_space<vmem>>, vector<5x128xf32>
      %cst_11 = arith.constant dense<0.000000e+00> : vector<5xf32>
      %18 = vector.multi_reduction <add>, %17, %cst_11 [1] : vector<5x128xf32> to vector<5xf32>
      %19 = vector.shape_cast %18 : vector<5xf32> to vector<5x1xf32>
      %cst_12 = arith.constant 0.001953125 : f32
      %20 = vector.broadcast %cst_12 : f32 to vector<5x1xf32>
      %21 = arith.mulf %16, %20 : vector<5x1xf32>
      %22 = arith.addf %13, %21 : vector<5x1xf32>
      %cst_13 = arith.constant 0.001953125 : f32
      %23 = vector.broadcast %cst_13 : f32 to vector<5x1xf32>
      %24 = arith.mulf %19, %23 : vector<5x1xf32>
      %25 = arith.mulf %21, %21 : vector<5x1xf32>
      %26 = arith.subf %24, %25 : vector<5x1xf32>
      %cst_14 = arith.constant 0.000000e+00 : f32
      %27 = vector.broadcast %cst_14 : f32 to vector<5x1xf32>
      %28 = arith.maximumf %26, %27 : vector<5x1xf32>
      %c0_15 = arith.constant 0 : index
      %c0_16 = arith.constant 0 : index
      %29 = vector.load %arg4[%c0_15, %c0_16] : memref<5x1xf32, #tpu.memory_space<vmem>>, vector<5x1xf32>
      %c0_17 = arith.constant 0 : index
      %c0_18 = arith.constant 0 : index
      %30 = vector.load %arg5[%c0_17, %c0_18] : memref<5x1xf32, #tpu.memory_space<vmem>>, vector<5x1xf32>
      %c0_19 = arith.constant 0 : index
      %c0_20 = arith.constant 0 : index
      %31 = vector.load %arg6[%c0_19, %c0_20] : memref<5x1xf32, #tpu.memory_space<vmem>>, vector<5x1xf32>
      %cst_21 = arith.constant 9.99999974E-6 : f32
      %32 = vector.broadcast %cst_21 : f32 to vector<5x1xf32>
      %33 = arith.addf %28, %32 : vector<5x1xf32>
      %34 = math.rsqrt %33 : vector<5x1xf32>
      %35 = arith.mulf %29, %34 : vector<5x1xf32>
      %36 = arith.mulf %31, %35 : vector<5x1xf32>
      %37 = arith.mulf %35, %35 : vector<5x1xf32>
      %38 = arith.mulf %37, %28 : vector<5x1xf32>
      %cst_22 = arith.constant 9.99999974E-6 : f32
      %39 = vector.broadcast %cst_22 : f32 to vector<5x1xf32>
      %40 = arith.addf %38, %39 : vector<5x1xf32>
      %41 = math.rsqrt %40 : vector<5x1xf32>
      %42 = arith.mulf %36, %41 : vector<5x1xf32>
      %43 = arith.mulf %29, %42 : vector<5x1xf32>
      %44 = arith.mulf %42, %42 : vector<5x1xf32>
      %45 = arith.mulf %44, %28 : vector<5x1xf32>
      %cst_23 = arith.constant 9.99999974E-6 : f32
      %46 = vector.broadcast %cst_23 : f32 to vector<5x1xf32>
      %47 = arith.addf %45, %46 : vector<5x1xf32>
      %48 = math.rsqrt %47 : vector<5x1xf32>
      %49 = arith.mulf %43, %48 : vector<5x1xf32>
      %50 = vector.shape_cast %49 : vector<5x1xf32> to vector<5x1xf32>
      %51 = vector.broadcast %50 : vector<5x1xf32> to vector<5x128xf32>
      %c0_24 = arith.constant 0 : index
      %c0_25 = arith.constant 0 : index
      %52 = vector.load %arg11[%c0_24, %c0_25] : memref<5x128xf32, #tpu.memory_space<vmem>>, vector<5x128xf32>
      tpu.vector_store %arg11[%c0_24, %c0_25], %51 {strides = array<i32>} : memref<5x128xf32, #tpu.memory_space<vmem>>, vector<5x128xf32>,
      %53 = arith.mulf %49, %22 : vector<5x1xf32>
      %54 = arith.subf %30, %53 : vector<5x1xf32>
      %55 = vector.shape_cast %54 : vector<5x1xf32> to vector<5x1xf32>
      %56 = vector.broadcast %55 : vector<5x1xf32> to vector<5x128xf32>
      %c0_26 = arith.constant 0 : index
      %c0_27 = arith.constant 0 : index
      %57 = vector.load %arg12[%c0_26, %c0_27] : memref<5x128xf32, #tpu.memory_space<vmem>>, vector<5x128xf32>
      tpu.vector_store %arg12[%c0_26, %c0_27], %56 {strides = array<i32>} : memref<5x128xf32, #tpu.memory_space<vmem>>, vector<5x128xf32>,
    } else {
    }
    %c1_i32_4 = arith.constant 1 : i32
    %10 = arith.cmpi eq, %arg0, %c1_i32_4 : i32
    %11 = arith.extui %10 : i1 to i32
    %c0_i32_5 = arith.constant 0 : i32
    %12 = arith.cmpi ne, %11, %c0_i32_5 : i32
    scf.if %12 {
      %c0 = arith.constant 0 : index
      %c0_6 = arith.constant 0 : index
      %13 = vector.load %arg11[%c0, %c0_6] : memref<5x128xf32, #tpu.memory_space<vmem>>, vector<5x128xf32>
      %c0_7 = arith.constant 0 : index
      %c0_8 = arith.constant 0 : index
      %14 = vector.load %arg12[%c0_7, %c0_8] : memref<5x128xf32, #tpu.memory_space<vmem>>, vector<5x128xf32>
      %c0_i32_9 = arith.constant 0 : i32
      %c128_i32 = arith.constant 128 : i32
      %15 = arith.muli %c0_i32_9, %c128_i32 : i32
      %16 = tpu.assume_multiple %15, 128 : i32
      %c0_10 = arith.constant 0 : index
      %c0_11 = arith.constant 0 : index
      %17 = arith.index_cast %16 : i32 to index
      %18 = vector.load %arg3[%c0_10, %c0_11, %17] : memref<2x5x256xf32, #tpu.memory_space<vmem>>, vector<2x5x128xf32>
      %19 = vector.shape_cast %13 : vector<5x128xf32> to vector<1x5x128xf32>
      %20 = vector.broadcast %19 : vector<1x5x128xf32> to vector<2x5x128xf32>
      %21 = arith.mulf %18, %20 : vector<2x5x128xf32>
      %22 = vector.shape_cast %14 : vector<5x128xf32> to vector<1x5x128xf32>
      %23 = vector.broadcast %22 : vector<1x5x128xf32> to vector<2x5x128xf32>
      %24 = arith.addf %21, %23 : vector<2x5x128xf32>
      %c0_12 = arith.constant 0 : index
      %c0_13 = arith.constant 0 : index
      %25 = arith.index_cast %16 : i32 to index
      %26 = vector.load %arg7[%c0_12, %c0_13, %25] : memref<2x5x256xf32, #tpu.memory_space<vmem>>, vector<2x5x128xf32>
      tpu.vector_store %arg7[%c0_12, %c0_13, %25], %24 {strides = array<i32>} : memref<2x5x256xf32, #tpu.memory_space<vmem>>, vector<2x5x128xf32>,
      %c1_i32_14 = arith.constant 1 : i32
      %c128_i32_15 = arith.constant 128 : i32
      %27 = arith.muli %c1_i32_14, %c128_i32_15 : i32
      %28 = tpu.assume_multiple %27, 128 : i32
      %c0_16 = arith.constant 0 : index
      %c0_17 = arith.constant 0 : index
      %29 = arith.index_cast %28 : i32 to index
      %30 = vector.load %arg3[%c0_16, %c0_17, %29] : memref<2x5x256xf32, #tpu.memory_space<vmem>>, vector<2x5x128xf32>
      %31 = vector.shape_cast %13 : vector<5x128xf32> to vector<1x5x128xf32>
      %32 = vector.broadcast %31 : vector<1x5x128xf32> to vector<2x5x128xf32>
      %33 = arith.mulf %30, %32 : vector<2x5x128xf32>
      %34 = vector.shape_cast %14 : vector<5x128xf32> to vector<1x5x128xf32>
      %35 = vector.broadcast %34 : vector<1x5x128xf32> to vector<2x5x128xf32>
      %36 = arith.addf %33, %35 : vector<2x5x128xf32>
      %c0_18 = arith.constant 0 : index
      %c0_19 = arith.constant 0 : index
      %37 = arith.index_cast %28 : i32 to index
      %38 = vector.load %arg7[%c0_18, %c0_19, %37] : memref<2x5x256xf32, #tpu.memory_space<vmem>>, vector<2x5x128xf32>
      tpu.vector_store %arg7[%c0_18, %c0_19, %37], %36 {strides = array<i32>} : memref<2x5x256xf32, #tpu.memory_space<vmem>>, vector<2x5x128xf32>,
      %c2_i32 = arith.constant 2 : i32
    } else {
    }
    return
  }
  func.func @transform_0(%arg0: i32, %arg1: i32, %arg2: i32) -> (i32, i32, i32) {
    %c0_i32 = arith.constant 0 : i32
    %c0_i32_0 = arith.constant 0 : i32
    return %arg1, %c0_i32, %arg2 : i32, i32, i32
  }
  func.func @transform_1(%arg0: i32, %arg1: i32, %arg2: i32) -> (i32, i32) {
    %c0_i32 = arith.constant 0 : i32
    %c0_i32_0 = arith.constant 0 : i32
    %c0_i32_1 = arith.constant 0 : i32
    return %c0_i32, %c0_i32_0 : i32, i32
  }
  func.func @transform_2(%arg0: i32, %arg1: i32, %arg2: i32) -> (i32, i32) {
    %c0_i32 = arith.constant 0 : i32
    %c0_i32_0 = arith.constant 0 : i32
    %c0_i32_1 = arith.constant 0 : i32
    return %c0_i32, %c0_i32_0 : i32, i32
  }
  func.func @transform_3(%arg0: i32, %arg1: i32, %arg2: i32) -> (i32, i32) {
    %c0_i32 = arith.constant 0 : i32
    %c0_i32_0 = arith.constant 0 : i32
    %c0_i32_1 = arith.constant 0 : i32
    return %c0_i32, %c0_i32_0 : i32, i32
  }
  func.func @transform_4(%arg0: i32, %arg1: i32, %arg2: i32) -> (i32, i32, i32) {
    %0 = arith.muli %arg1, %arg0 : i32
    %1 = arith.muli %arg2, %arg0 : i32
    %c0_i32 = arith.constant 0 : i32
    %c0_i32_0 = arith.constant 0 : i32
    return %0, %c0_i32, %1 : i32, i32, i32
  }
}

</mosaic_0001>

<llo_original>
// kernel: tpu_custom_call.1
$region0: #{tpu_custom_call.1}
  #allocation0 [shape = 'u32[]', space=smem, size = 0x4, offset = 0x4, fixed_abs, tag = 'smem constant byte address 0x4 - core index']
  #allocation1 [shape = 'u32[144,128]{1,0:T(1,128)}', space=vmem, size = 0x12000, scoped, tag = 'internal scratch']
  #allocation2 [shape = 'f32[5,128]{1,0:T(8,128)}', space=vmem, size = 0x1000, scoped, tag = 'scratch operand']
  #allocation3 [shape = 'f32[5,128]{1,0:T(8,128)}', space=vmem, size = 0x1000, scoped, tag = 'scratch operand']
  #allocation4 [shape = 'f32[5,1]{1,0:T(8,128)}', space=vmem, size = 0x1000, scoped, tag = 'scratch operand']
  #allocation5 [shape = 'f32[5,128]{1,0:T(8,128)}', space=vmem, size = 0x1000, scoped, tag = 'scratch operand']
  #allocation6 [shape = 'f32[5,128]{1,0:T(8,128)}', space=vmem, size = 0x1000, scoped, tag = 'scratch operand']
  %s0 = inlined_call_operand.vmem [shape: f32[2,5,256], index: 0, kind: input, shape index: {}]
  %s1 = inlined_call_operand.vmem [shape: f32[5,1], index: 1, kind: input, shape index: {}]
  %s2 = inlined_call_operand.vmem [shape: f32[5,1], index: 2, kind: input, shape index: {}]
  %s3 = inlined_call_operand.vmem [shape: f32[5,1], index: 3, kind: input, shape index: {}]
  %s4 = inlined_call_operand.vmem [shape: f32[2,5,256], index: 4, kind: output, shape index: {}]
  %s5 = sld [smem:[#allocation0]]
  $region65: #{tpu_custom_call.1} parent=0
    _
  %s7 = ssub.s32 1, %s5
  %s8 = scalar_select 0, %s7, %s5
  loop: start=0, step=1, limit=4
  $region2: #{tpu_custom_call.1} parent=0 // loop_pre_header
    _
  $region3: #{tpu_custom_call.1} parent=0 // loop_header
    %s10 = sphi 0, %s14
    %p11 = scmp.ge.s32.totalorder %s10, 4
    %s17 = sphi 0, %s36
    %s18 = sphi 0, %s32
    %s19 = sphi 0, %s28
    %s20 = sphi 0, %s17
    %s21 = sphi 0, %s18
    %s22 = sphi 0, %s19
    %s23 = sphi 0, %s20
    %s24 = sphi 0, %s21
    %s25 = sphi 0, %s22
    %s41 = sphi 0, %s43
    %s44 = sphi 0, %s41
    %s45 = sphi 0, %s44
    %s61 = sphi 0, %s45
    %s65 = sphi 0, %s65
    %s67 = sphi 0, %s65
    %s68 = sphi 0, %s67
    %s82 = sphi 0, %s68
    %s86 = sphi 0, %s86
    %s88 = sphi 0, %s86
    %s89 = sphi 0, %s88
    %s103 = sphi 0, %s89
    %s107 = sphi 0, %s107
    %s109 = sphi 0, %s107
    %s110 = sphi 0, %s109
    %s124 = sphi 0, %s110
    %s136 = sphi 0, %s138
    %s139 = sphi 0, %s136
    %s140 = sphi 0, %s139
    %s156 = sphi 0, %s140
  $region4: #{tpu_custom_call.1} parent=0 // loop_header_branch
    %13 = sbr.rel (%p11) target = $region8
  $region5: #{tpu_custom_call.1} parent=0 // loop_body
    %s15 = ssub.s32 %s10, 1
    %s16 = ssub.s32 %s10, 2
    %s26 = sadd.s32 1, %s19
    %p27 = scmp.ge.s32.totalorder %s26, 1
    %s28 = scalar_select %p27, 0, %s26
    %s29 = sadd.s32 1, %s18
    %s30 = scalar_select %p27, %s29, %s18
    %p31 = scmp.ge.s32.totalorder %s30, 1
    %s32 = scalar_select %p31, 0, %s30
    %s33 = sadd.s32 1, %s17
    %s34 = scalar_select %p31, %s33, %s17
    %p35 = scmp.ge.s32.totalorder %s34, 2
    %s36 = scalar_select %p35, 0, %s34
    %s37 = ssub.s32 %s18, %s32
    %s38 = ssub.s32 %s19, %s28
    %s39 = sor.u32 %s37, %s38
    %p40 = scmp.eq.s32.totalorder %s39, 0
    %s42 = sadd.s32 %s41, 1
    %s43 = scalar_select %p40, %s41, %s42
    %p46 = pneg %p40
    %p47 = scmp.eq.s32.totalorder %s10, 1
    %p48 = por %p46, %p47
    %p49 = scmp.ne.s32.totalorder %s41, %s44
    %p50 = scmp.eq.s32.totalorder %s10, 0
    %p51 = por %p49, %p50
    %p52 = scmp.ne.s32.totalorder %s41, %s44
    %p53 = scmp.eq.s32.totalorder %s15, 1
    %p54 = por %p52, %p53
    %p55 = scmp.ne.s32.totalorder %s44, %s45
    %p56 = scmp.eq.s32.totalorder %s15, 0
    %p57 = por %p55, %p56
    %p58 = scmp.ne.s32.totalorder %s44, %s45
    %p59 = scmp.eq.s32.totalorder %s16, 1
    %p60 = por %p58, %p59
    %p62 = scmp.ne.s32.totalorder %s45, %s61
    %p63 = scmp.eq.s32.totalorder %s16, 0
    %p64 = por %p62, %p63
    %s66 = sadd.s32 %s65, 1
    %p69 = scmp.eq.s32.totalorder %s10, 1
    %p70 = scmp.ne.s32.totalorder %s65, %s67
    %p71 = scmp.eq.s32.totalorder %s10, 0
    %p72 = por %p70, %p71
    %p73 = scmp.ne.s32.totalorder %s65, %s67
    %p74 = scmp.eq.s32.totalorder %s15, 1
    %p75 = por %p73, %p74
    %p76 = scmp.ne.s32.totalorder %s67, %s68
    %p77 = scmp.eq.s32.totalorder %s15, 0
    %p78 = por %p76, %p77
    %p79 = scmp.ne.s32.totalorder %s67, %s68
    %p80 = scmp.eq.s32.totalorder %s16, 1
    %p81 = por %p79, %p80
    %p83 = scmp.ne.s32.totalorder %s68, %s82
    %p84 = scmp.eq.s32.totalorder %s16, 0
    %p85 = por %p83, %p84
    %s87 = sadd.s32 %s86, 1
    %p90 = scmp.eq.s32.totalorder %s10, 1
    %p91 = scmp.ne.s32.totalorder %s86, %s88
    %p92 = scmp.eq.s32.totalorder %s10, 0
    %p93 = por %p91, %p92
    %p94 = scmp.ne.s32.totalorder %s86, %s88
    %p95 = scmp.eq.s32.totalorder %s15, 1
    %p96 = por %p94, %p95
    %p97 = scmp.ne.s32.totalorder %s88, %s89
    %p98 = scmp.eq.s32.totalorder %s15, 0
    %p99 = por %p97, %p98
    %p100 = scmp.ne.s32.totalorder %s88, %s89
    %p101 = scmp.eq.s32.totalorder %s16, 1
    %p102 = por %p100, %p101
    %p104 = scmp.ne.s32.totalorder %s89, %s103
    %p105 = scmp.eq.s32.totalorder %s16, 0
    %p106 = por %p104, %p105
    %s108 = sadd.s32 %s107, 1
    %p111 = scmp.eq.s32.totalorder %s10, 1
    %p112 = scmp.ne.s32.totalorder %s107, %s109
    %p113 = scmp.eq.s32.totalorder %s10, 0
    %p114 = por %p112, %p113
    %p115 = scmp.ne.s32.totalorder %s107, %s109
    %p116 = scmp.eq.s32.totalorder %s15, 1
    %p117 = por %p115, %p116
    %p118 = scmp.ne.s32.totalorder %s109, %s110
    %p119 = scmp.eq.s32.totalorder %s15, 0
    %p120 = por %p118, %p119
    %p121 = scmp.ne.s32.totalorder %s109, %s110
    %p122 = scmp.eq.s32.totalorder %s16, 1
    %p123 = por %p121, %p122
    %p125 = scmp.ne.s32.totalorder %s110, %s124
    %p126 = scmp.eq.s32.totalorder %s16, 0
    %p127 = por %p125, %p126
    %s128 = smul.u32 %s18, %s17
    %s129 = smul.u32 %s19, %s17
    %s130 = smul.u32 %s32, %s36
    %s131 = smul.u32 %s28, %s36
    %s132 = ssub.s32 %s128, %s130
    %s133 = ssub.s32 %s129, %s131
    %s134 = sor.u32 %s132, %s133
    %p135 = scmp.eq.s32.totalorder %s134, 0
    %s137 = sadd.s32 %s136, 1
    %s138 = scalar_select %p135, %s136, %s137
    %p141 = pneg %p135
    %p142 = scmp.eq.s32.totalorder %s10, 1
    %p143 = por %p141, %p142
    %p144 = scmp.ne.s32.totalorder %s136, %s139
    %p145 = scmp.eq.s32.totalorder %s10, 0
    %p146 = por %p144, %p145
    %p147 = scmp.ne.s32.totalorder %s136, %s139
    %p148 = scmp.eq.s32.totalorder %s15, 1
    %p149 = por %p147, %p148
    %p150 = scmp.ne.s32.totalorder %s139, %s140
    %p151 = scmp.eq.s32.totalorder %s15, 0
    %p152 = por %p150, %p151
    %p153 = scmp.ne.s32.totalorder %s139, %s140
    %p154 = scmp.eq.s32.totalorder %s16, 1
    %p155 = por %p153, %p154
    %p157 = scmp.ne.s32.totalorder %s140, %s156
    %p158 = scmp.eq.s32.totalorder %s16, 0
    %p159 = por %p157, %p158
    %p160 = scmp.le.s32.totalorder 1, %s10
    %p161 = scmp.lt.s32.totalorder %s10, 3
    %p162 = pnand %p160, %p161
    %p163 = pneg %p162
    // Predicated region
    $region9: #{tpu_custom_call.1} parent=5 // pred_check
      _
    $region10: #{tpu_custom_call.1} parent=5 // pred_check_branch
      %165 = sbr.rel (%p162) target = $region12
    $region11: #{tpu_custom_call.1} parent=5 // pred_region
      %s166 = ssub.s32 %s10, 1
      // Predicated region
      $region13: #{tpu_custom_call.1} parent=11 // pred_check
        %p167 = pneg %p57
      $region14: #{tpu_custom_call.1} parent=11 // pred_check_branch
        %169 = sbr.rel (%p167) target = $region16
      $region15: #{tpu_custom_call.1} parent=11 // pred_region
        %s170 = smul.u32 2, %s21
        %s171 = smul.u32 2, %s22
        %p172 = scmp.lt.s32.totalorder %s170, 1
        %s173 = scalar_select %p172, %s170, 1
        %p174 = scmp.lt.s32.totalorder %s171, 1
        %s175 = scalar_select %p174, %s171, 1
        %s176 = smul.addr %s173, 2
        %s177 = sadd.s32 %s175, %s176
        %s178 = smul.addr %s177, 8
        %s179 = scalar_lea.vmem %s0, %s178
        %s180 = smul.u32 2, %s21
        %s181 = smul.u32 2, %s22
      $region16: #{tpu_custom_call.1} parent=11 // pred_fallthru
        _
      // Predicated region
      $region17: #{tpu_custom_call.1} parent=11 // pred_check
        %p182 = pneg %p78
      $region18: #{tpu_custom_call.1} parent=11 // pred_check_branch
        %184 = sbr.rel (%p182) target = $region20
      $region19: #{tpu_custom_call.1} parent=11 // pred_region
        _
      $region20: #{tpu_custom_call.1} parent=11 // pred_fallthru
        _
      // Predicated region
      $region21: #{tpu_custom_call.1} parent=11 // pred_check
        %p185 = pneg %p99
      $region22: #{tpu_custom_call.1} parent=11 // pred_check_branch
        %187 = sbr.rel (%p185) target = $region24
      $region23: #{tpu_custom_call.1} parent=11 // pred_region
        _
      $region24: #{tpu_custom_call.1} parent=11 // pred_fallthru
        _
      // Predicated region
      $region25: #{tpu_custom_call.1} parent=11 // pred_check
        %p188 = pneg %p120
      $region26: #{tpu_custom_call.1} parent=11 // pred_check_branch
        %190 = sbr.rel (%p188) target = $region28
      $region27: #{tpu_custom_call.1} parent=11 // pred_region
        _
      $region28: #{tpu_custom_call.1} parent=11 // pred_fallthru
        _
    $region12: #{tpu_custom_call.1} parent=5 // pred_fallthru
      _
    %p191 = scmp.lt.s32.totalorder %s10, 2
    // Predicated region
    $region29: #{tpu_custom_call.1} parent=5 // pred_check
      %p192 = pneg %p191
    $region30: #{tpu_custom_call.1} parent=5 // pred_check_branch
      %194 = sbr.rel (%p192) target = $region32
    $region31: #{tpu_custom_call.1} parent=5 // pred_region
      _
    $region32: #{tpu_custom_call.1} parent=5 // pred_fallthru
      _
    %p195 = scmp.le.s32.totalorder 1, %s10
    %p196 = scmp.lt.s32.totalorder %s10, 3
    %p197 = pnand %p195, %p196
    %p198 = pneg %p197
    // Predicated region
    $region33: #{tpu_custom_call.1} parent=5 // pred_check
      _
    $region34: #{tpu_custom_call.1} parent=5 // pred_check_branch
      %200 = sbr.rel (%p197) target = $region36
    $region35: #{tpu_custom_call.1} parent=5 // pred_region
      %s201 = ssub.s32 %s10, 1
      %s202 = smul.u32 2, %s21
      %s203 = smul.u32 2, %s22
      %p204 = scmp.lt.s32.totalorder %s202, 1
      %s205 = scalar_select %p204, %s202, 1
      %p206 = scmp.lt.s32.totalorder %s203, 1
      %s207 = scalar_select %p206, %s203, 1
      %s208 = smul.addr %s205, 2
      %s209 = sadd.s32 %s207, %s208
      %s210 = smul.addr %s209, 8
      %s211 = scalar_lea.vmem %s0, %s210
      %p212 = pneg %p57
      %p213 = pneg %p54
      %p214 = pneg %p78
      %p215 = pneg %p75
      %p216 = pneg %p99
      %p217 = pneg %p96
      %p218 = pneg %p120
      %p219 = pneg %p117
      %p220 = pneg %p152
      %p221 = pneg %p149
      %s222 = smul.u32 %s21, %s20
      %s223 = smul.u32 %s22, %s20
      %s224 = smul.u32 2, %s222
      %s225 = smul.u32 2, %s223
      %p226 = scmp.lt.s32.totalorder %s224, 1
      %s227 = scalar_select %p226, %s224, 1
      %p228 = scmp.lt.s32.totalorder %s225, 1
      %s229 = scalar_select %p228, %s225, 1
      %s230 = smul.addr %s227, 2
      %s231 = sadd.s32 %s229, %s230
      %s232 = smul.addr %s231, 8
      %s233 = scalar_lea.vmem %s4, %s232
      %s234 = smul.u32 2, %s21
      %s235 = smul.u32 2, %s22
      %p236 = scmp.lt.s32.totalorder %s234, 1
      %s237 = scalar_select %p236, %s234, 1
      %p238 = scmp.lt.s32.totalorder %s235, 1
      %s239 = scalar_select %p238, %s235, 1
      %s240 = smul.addr %s237, 2
      %s241 = sadd.s32 %s239, %s240
      %s242 = smul.addr %s241, 8
      %s243 = scalar_lea.vmem %s0, %s242
      %s244 = smul.u32 2, %s21
      %s245 = smul.u32 2, %s22
      %s246 = smul.u32 %s21, %s20
      %s247 = smul.u32 %s22, %s20
      %s248 = smul.u32 2, %s246
      %s249 = smul.u32 2, %s247
      %p250 = scmp.lt.s32.totalorder %s248, 1
      %s251 = scalar_select %p250, %s248, 1
      %p252 = scmp.lt.s32.totalorder %s249, 1
      %s253 = scalar_select %p252, %s249, 1
      %s254 = smul.addr %s251, 2
      %s255 = sadd.s32 %s253, %s254
      %s256 = smul.addr %s255, 8
      %s257 = scalar_lea.vmem %s4, %s256
      %s258 = smul.u32 %s21, %s20
      %s259 = smul.u32 %s22, %s20
      %s260 = smul.u32 2, %s258
      %s261 = smul.u32 2, %s259
      %p262 = scmp.eq.s32.totalorder %s20, 0
      // Predicated region
      $region37: #{tpu_custom_call.1} parent=35 // pred_check
        %p263 = pneg %p262
      $region38: #{tpu_custom_call.1} parent=35 // pred_check_branch
        %265 = sbr.rel (%p263) target = $region40
      $region39: #{tpu_custom_call.1} parent=35 // pred_region
        %p266 = scmp.eq.s32.totalorder %s21, 0
        %p267 = scmp.eq.s32.totalorder %s22, 0
        %p268 = pnand %p266, %p267
        %p269 = pneg %p268
        // Predicated region
        $region41: #{tpu_custom_call.1} parent=39 // pred_check
          _
        $region42: #{tpu_custom_call.1} parent=39 // pred_check_branch
          %271 = sbr.rel (%p268) target = $region44
        $region43: #{tpu_custom_call.1} parent=39 // pred_region
          %v272 = vld [vmem:[%s243] sm:$0x1f]
          %vm273 = vcmask 4096
          %274 = vst.msk [vmem:[#allocation4] sm:$0x1f] %vm273, %v272
          %275 = vst [vmem:[#allocation2] sm:$0x1f] 0.0
          %276 = vst [vmem:[#allocation3] sm:$0x1f] 0.0
        $region44: #{tpu_custom_call.1} parent=39 // pred_fallthru
          _
        %v277 = vld [vmem:[#allocation4] sm:$0x1f]
        %v278 = vld [vmem:[#allocation2] sm:$0x1f]
        %v279 = vld [vmem:[#allocation3] sm:$0x1f]
        %v280 = vld [vmem:[%s243] sm:$0x1f]
        %v281 = vld [vmem:[%s243 + $0x10] sm:$0x1f]
        %283 = vset.pattern.permute.xlu0 0
        %284 = vperm.xlu0 %283, %v277
        %v285 = vpop.permute.xlu0 %284
        %v287 = vsub.f32 %v280, %v285
        %v288 = vsub.f32 %v281, %v285
        %vm289 = vcmask 1044480
        %v290 = vsel %vm289, %v287, 0.0
        %v291 = vsel %vm289, %v288, 0.0
        %v292 = vadd.f32 %v290, %v291
        %v293 = vadd.f32 %v278, %v292
        %v294 = vmul.f32 %v287, %v287
        %v295 = vmul.f32 %v288, %v288
        %v296 = vsel %vm289, %v294, 0.0
        %v297 = vsel %vm289, %v295, 0.0
        %v298 = vadd.f32 %v296, %v297
        %v299 = vadd.f32 %v279, %v298
        %s300 = scalar_lea.vmem %s243, 8
        %v301 = vld [vmem:[%s300] sm:$0x1f]
        %v302 = vld [vmem:[%s300 + $0x10] sm:$0x1f]
        %v303 = vsub.f32 %v301, %v285
        %v304 = vsub.f32 %v302, %v285
        %v305 = vsel %vm289, %v303, 0.0
        %v306 = vsel %vm289, %v304, 0.0
        %v307 = vadd.f32 %v305, %v306
        %v308 = vadd.f32 %v293, %v307
        %v309 = vmul.f32 %v303, %v303
        %v310 = vmul.f32 %v304, %v304
        %v311 = vsel %vm289, %v309, 0.0
        %v312 = vsel %vm289, %v310, 0.0
        %v313 = vadd.f32 %v311, %v312
        %v314 = vadd.f32 %v299, %v313
        %315 = vst [vmem:[#allocation2] sm:$0x1f] %v308
        %316 = vst [vmem:[#allocation3] sm:$0x1f] %v314
      $region40: #{tpu_custom_call.1} parent=35 // pred_fallthru
        _
      %p317 = scmp.eq.s32.totalorder %s20, 1
      %p318 = scmp.eq.s32.totalorder %s21, 0
      %p319 = pnand %p317, %p318
      %p320 = pneg %p319
      %p321 = scmp.eq.s32.totalorder %s22, 0
      %p322 = pnand %p320, %p321
      %p323 = pneg %p322
      // Predicated region
      $region45: #{tpu_custom_call.1} parent=35 // pred_check
        _
      $region46: #{tpu_custom_call.1} parent=35 // pred_check_branch
        %325 = sbr.rel (%p322) target = $region48
      $region47: #{tpu_custom_call.1} parent=35 // pred_region
        %v326 = vld [vmem:[#allocation4] sm:$0x1f]
        %v327 = vld [vmem:[#allocation2] sm:$0x1f]
        %vm328 = vcmask 1044480
        %v329 = vsel %vm328, %v327, 0.0
        %330 = vadd.xlane.f32.xlu0 %v329
        %v331 = vpop.xlane.xlu0 %330
        %v332 = vld [vmem:[#allocation3] sm:$0x1f]
        %v333 = vsel %vm328, %v332, 0.0
        %334 = vadd.xlane.f32.xlu0 %v333
        %v335 = vpop.xlane.xlu0 %334
        %v336 = vmul.f32 %v331, 0.001953125
        %v337 = vadd.f32 %v326, %v336
        %v338 = vmul.f32 %v335, 0.001953125
        %v339 = vmul.f32 %v336, %v336
        %v340 = vsub.f32 %v338, %v339
        %v341 = vmax.f32 %v340, 0.0
        %v342 = vld [vmem:[%s1] sm:$0x1f]
        %v343 = vld [vmem:[%s2] sm:$0x1f]
        %v344 = vld [vmem:[%s3] sm:$0x1f]
        %v345 = vadd.f32 %v341, 1e-05
        %v346 = vrsqrt.pop %v345
        %v347 = vmul.f32 %v342, %v346
        %v348 = vmul.f32 %v344, %v347
        %v349 = vmul.f32 %v347, %v347
        %v350 = vmul.f32 %v349, %v341
        %v351 = vadd.f32 %v350, 1e-05
        %v352 = vrsqrt.pop %v351
        %v353 = vmul.f32 %v348, %v352
        %v354 = vmul.f32 %v342, %v353
        %v355 = vmul.f32 %v353, %v353
        %v356 = vmul.f32 %v355, %v341
        %v357 = vadd.f32 %v356, 1e-05
        %v358 = vrsqrt.pop %v357
        %v359 = vmul.f32 %v354, %v358
        %361 = vset.pattern.permute.xlu0 0
        %362 = vperm.xlu0 %361, %v359
        %v363 = vpop.permute.xlu0 %362
        %365 = vst [vmem:[#allocation5] sm:$0x1f] %v363
        %v366 = vmul.f32 %v359, %v337
        %v367 = vsub.f32 %v343, %v366
        %369 = vset.pattern.permute.xlu0 0
        %370 = vperm.xlu0 %369, %v367
        %v371 = vpop.permute.xlu0 %370
        %373 = vst [vmem:[#allocation6] sm:$0x1f] %v371
      $region48: #{tpu_custom_call.1} parent=35 // pred_fallthru
        _
      // Predicated region
      $region49: #{tpu_custom_call.1} parent=35 // pred_check
        %p374 = pneg %p317
      $region50: #{tpu_custom_call.1} parent=35 // pred_check_branch
        %376 = sbr.rel (%p374) target = $region52
      $region51: #{tpu_custom_call.1} parent=35 // pred_region
        %v377 = vld [vmem:[#allocation5] sm:$0x1f]
        %v378 = vld [vmem:[#allocation6] sm:$0x1f]
        %v379 = vld [vmem:[%s243] sm:$0x1f]
        %v380 = vld [vmem:[%s243 + $0x10] sm:$0x1f]
        %v381 = vmul.f32 %v379, %v377
        %v382 = vmul.f32 %v380, %v377
        %v383 = vadd.f32 %v381, %v378
        %v384 = vadd.f32 %v382, %v378
        %385 = vst [vmem:[%s257] sm:$0x1f] %v383
        %386 = vst [vmem:[%s257 + $0x10] sm:$0x1f] %v384
        %s387 = scalar_lea.vmem %s243, 8
        %v388 = vld [vmem:[%s387] sm:$0x1f]
        %v389 = vld [vmem:[%s387 + $0x10] sm:$0x1f]
        %v390 = vmul.f32 %v388, %v377
        %v391 = vmul.f32 %v389, %v377
        %v392 = vadd.f32 %v390, %v378
        %v393 = vadd.f32 %v391, %v378
        %s394 = scalar_lea.vmem %s257, 8
        %395 = vst [vmem:[%s394] sm:$0x1f] %v392
        %396 = vst [vmem:[%s394 + $0x10] sm:$0x1f] %v393
      $region52: #{tpu_custom_call.1} parent=35 // pred_fallthru
        _
      %s397 = smul.u32 %s21, %s20
      %s398 = smul.u32 %s22, %s20
      %s399 = smul.u32 2, %s397
      %s400 = smul.u32 2, %s398
      %p401 = scmp.lt.s32.totalorder %s399, 1
      %s402 = scalar_select %p401, %s399, 1
      %p403 = scmp.lt.s32.totalorder %s400, 1
      %s404 = scalar_select %p403, %s400, 1
      %s405 = smul.addr %s402, 2
      %s406 = sadd.s32 %s404, %s405
      %s407 = smul.addr %s406, 8
      %s408 = scalar_lea.vmem %s4, %s407
      // Predicated region
      $region53: #{tpu_custom_call.1} parent=35 // pred_check
        %p409 = pneg %p149
      $region54: #{tpu_custom_call.1} parent=35 // pred_check_branch
        %411 = sbr.rel (%p409) target = $region56
      $region55: #{tpu_custom_call.1} parent=35 // pred_region
        %s412 = smul.u32 %s21, %s20
        %s413 = smul.u32 %s22, %s20
        %s414 = smul.u32 2, %s412
        %s415 = smul.u32 2, %s413
      $region56: #{tpu_custom_call.1} parent=35 // pred_fallthru
        _
    $region36: #{tpu_custom_call.1} parent=5 // pred_fallthru
      _
    %p416 = scmp.le.s32.totalorder 2, %s10
    // Predicated region
    $region57: #{tpu_custom_call.1} parent=5 // pred_check
      %p417 = pneg %p416
    $region58: #{tpu_custom_call.1} parent=5 // pred_check_branch
      %419 = sbr.rel (%p417) target = $region60
    $region59: #{tpu_custom_call.1} parent=5 // pred_region
      %s420 = ssub.s32 %s10, 2
      // Predicated region
      $region61: #{tpu_custom_call.1} parent=59 // pred_check
        %p421 = pneg %p155
      $region62: #{tpu_custom_call.1} parent=59 // pred_check_branch
        %423 = sbr.rel (%p421) target = $region64
      $region63: #{tpu_custom_call.1} parent=59 // pred_region
        %s424 = smul.u32 %s24, %s23
        %s425 = smul.u32 %s25, %s23
        %s426 = smul.u32 2, %s424
        %s427 = smul.u32 2, %s425
        %p428 = scmp.lt.s32.totalorder %s426, 1
        %s429 = scalar_select %p428, %s426, 1
        %p430 = scmp.lt.s32.totalorder %s427, 1
        %s431 = scalar_select %p430, %s427, 1
        %s432 = smul.addr %s429, 2
        %s433 = sadd.s32 %s431, %s432
        %s434 = smul.addr %s433, 8
        %s435 = scalar_lea.vmem %s4, %s434
      $region64: #{tpu_custom_call.1} parent=59 // pred_fallthru
        _
    $region60: #{tpu_custom_call.1} parent=5 // pred_fallthru
      _
  $region6: #{tpu_custom_call.1} parent=0 // loop_footer
    %s14 = sadd.s32 1, %s10
  $region7: #{tpu_custom_call.1} parent=0 // loop_footer_branch
    %9 = sbr.rel target = $region3
  $region8: #{tpu_custom_call.1} parent=0 // loop_exit
    _

</llo_original>
